<compile_context>
chip_gen: v7x
topology: tpu7x:2x2x1
jax: 0.10.0
libtpu: 0.0.40
codegen_flags: <defaults>
</compile_context>

<pallas_src>
import functools

import jax
import jax.numpy as jnp
from jax.experimental import pallas as pl
from jax.experimental.pallas import tpu as pltpu


def _cam_kernel(x_ref, w1t_ref, w2t_ref, o_ref, *, hw_true, hw_pad):
    # x_ref  : VMEM (TN, C, HW_pad)  block of flattened images (native dtype)
    # w1t_ref: VMEM (C, Cr)          first 1x1-conv weight, transposed (f32)
    # w2t_ref: VMEM (Cr, C)          second 1x1-conv weight, transposed (f32)
    # o_ref  : VMEM (TN, 1, C)       per-image channel-attention weights (f32)
    tn = x_ref.shape[0]
    x = x_ref[...]                                       # (TN, C, HW_pad)

    # Global max pool (exact in the native dtype). Zero padding (if any) is
    # masked to the dtype minimum so it cannot win the max.
    if hw_pad == hw_true:
        mx = jnp.max(x, axis=-1)
    else:
        col = jax.lax.broadcasted_iota(jnp.int32, x.shape, 2)
        if jnp.issubdtype(x.dtype, jnp.floating):
            neg = jnp.asarray(jnp.finfo(x.dtype).min, x.dtype)
        else:
            neg = jnp.asarray(jnp.iinfo(x.dtype).min, x.dtype)
        mx = jnp.max(jnp.where(col < hw_true, x, neg), axis=-1)
    mx = mx.astype(jnp.float32)                          # (TN, C)

    # Global avg pool: f32-accumulated sum (zero padding contributes nothing),
    # divided by the true spatial size. No full f32 copy of the block.
    avg = jnp.sum(x, axis=-1, dtype=jnp.float32) * (1.0 / hw_true)   # (TN, C)

    # Shared MLP (two bias-free 1x1 convs == two small matmuls), run once on
    # the stacked [avg; max] rows.
    v = jnp.concatenate([avg, mx], axis=0)               # (2*TN, C) f32
    h = jnp.maximum(
        jnp.dot(v, w1t_ref[...], preferred_element_type=jnp.float32), 0.0)
    y = jnp.dot(h, w2t_ref[...], preferred_element_type=jnp.float32)  # (2*TN, C)

    o_ref[:, 0, :] = jax.nn.sigmoid(y[:tn] + y[tn:])     # (TN, C)


def _tpu_generation_info():
    """(vmem_capacity_bytes, tensorcores_per_chip) with safe fallbacks."""
    vmem_cap = 64 * 1024 * 1024          # conservative default (v7x-sized)
    num_tc = 1
    try:
        info = pltpu.get_tpu_info()
        vmem_cap = int(info.vmem_capacity_bytes)
    except Exception:
        pass
    try:
        kind = jax.devices()[0].device_kind.lower()
        if "v7" in kind:                 # only v7x has 2 TensorCores per chip
            num_tc = 2
    except Exception:
        pass
    return vmem_cap, num_tc


def channel_attention_pallas(x, w1, w2, *, block_n=None, vmem_limit_bytes=None):
    """x: (N, C, H, W); w1: (Cr, C, 1, 1); w2: (C, Cr, 1, 1) -> (N, C, 1, 1) f32."""
    N, C, H, W = x.shape
    Cr = w1.shape[0]
    HW = H * W
    dtype_bytes = jnp.dtype(x.dtype).itemsize

    # Lane-dense spatial axis: pad H*W up to a multiple of 128 (zeros; the
    # kernel masks the max and divides the mean by the true H*W).
    HW_pad = -(-HW // 128) * 128
    x3 = x.reshape(N, C, HW)
    if HW_pad != HW:
        x3 = jnp.pad(x3, ((0, 0), (0, 0), (0, HW_pad - HW)))

    # ---- generation-aware block sizing (pure HBM-streaming kernel) --------
    vmem_cap, num_tc = _tpu_generation_info()
    if vmem_limit_bytes is None:
        # ~60% of physical VMEM, clamped to [32 MiB, 96 MiB].
        vmem_limit_bytes = int(min(max((vmem_cap * 6) // 10, 32 * 1024 * 1024),
                                   96 * 1024 * 1024))
    per_image_bytes = C * HW_pad * dtype_bytes
    if block_n is None:
        # Two pipeline buffers of the x block should use ~60% of the scoped
        # limit  =>  one block <= ~30% of the limit.
        budget = (vmem_limit_bytes * 3) // 10
        block_n = max(1, budget // per_image_bytes)
    block_n = int(max(1, min(block_n, N)))

    steps = -(-N // block_n)
    if num_tc == 2:
        # Keep both TensorCores busy: at least 2 steps, and an even step count.
        if steps == 1 and N >= 2:
            steps = 2
        elif steps % 2:
            steps += 1
        block_n = -(-N // steps)
        steps = -(-N // block_n)
    N_pad = steps * block_n
    if N_pad != N:
        # Pad the batch instead of shrinking block_n to 1 for awkward N; the
        # padded rows produce harmless values that are sliced off below.
        x3 = jnp.pad(x3, ((0, N_pad - N), (0, 0), (0, 0)))

    w1t = w1.reshape(Cr, C).T.astype(jnp.float32)        # (C, Cr)
    w2t = w2.reshape(C, Cr).T.astype(jnp.float32)        # (Cr, C)

    # Deeper pipelining only when blocks are small and the grid is long
    # (exposed-DMA regime); never triggered when block_n is VMEM-sized.
    x_block_bytes = block_n * per_image_bytes
    x_spec = pl.BlockSpec((block_n, C, HW_pad), lambda n: (n, 0, 0))
    if steps >= 3 and x_block_bytes < (2 * 1024 * 1024):
        try:
            x_spec = pl.BlockSpec((block_n, C, HW_pad), lambda n: (n, 0, 0),
                                  pipeline_mode=pl.Buffered(3))
        except TypeError:
            pass  # older BlockSpec signature: fall back to default double buffer

    kernel = functools.partial(_cam_kernel, hw_true=HW, hw_pad=HW_pad)

    out = pl.pallas_call(
        kernel,
        out_shape=jax.ShapeDtypeStruct((N_pad, 1, C), jnp.float32),
        grid=(steps,),
        in_specs=[
            x_spec,                                            # x, native dtype
            pl.BlockSpec((C, Cr), lambda n: (0, 0)),           # w1^T (resident)
            pl.BlockSpec((Cr, C), lambda n: (0, 0)),           # w2^T (resident)
        ],
        out_specs=pl.BlockSpec((block_n, 1, C), lambda n: (n, 0, 0)),
        compiler_params=pltpu.CompilerParams(
            dimension_semantics=("parallel",),
            vmem_limit_bytes=vmem_limit_bytes),
    )(x3, w1t, w2t)

    return out[:N].reshape(N, C, 1, 1)


def _reference(x, w1, w2):
    """Pure-JAX reference matching the PyTorch ChannelAttentionModule forward."""
    N, C, H, W = x.shape
    Cr = w1.shape[0]
    avg = jnp.mean(x, axis=(2, 3))                       # (N, C)
    mx = jnp.max(x, axis=(2, 3))                         # (N, C)
    w1m = w1.reshape(Cr, C)
    w2m = w2.reshape(C, Cr)

    def mlp(v):
        return jnp.maximum(v @ w1m.T, 0.0) @ w2m.T

    out = jax.nn.sigmoid(mlp(avg) + mlp(mx))             # (N, C)
    return out.reshape(N, C, 1, 1)


if __name__ == "__main__":
    key = jax.random.PRNGKey(0)
    kx, kw1, kw2 = jax.random.split(key, 3)

    N, C, H, W = 2, 32, 16, 16
    ratio = 16
    Cr = C // ratio                                      # 2

    x = jax.random.normal(kx, (N, C, H, W), dtype=jnp.float32)

    # nn.Conv2d default init: uniform(-b, b) with b = 1/sqrt(fan_in).
    b1 = 1.0 / jnp.sqrt(jnp.float32(C * 1 * 1))
    b2 = 1.0 / jnp.sqrt(jnp.float32(Cr * 1 * 1))
    w1 = jax.random.uniform(kw1, (Cr, C, 1, 1), jnp.float32, -b1, b1)
    w2 = jax.random.uniform(kw2, (C, Cr, 1, 1), jnp.float32, -b2, b2)

    out = jax.block_until_ready(channel_attention_pallas(x, w1, w2))
    ref = jax.block_until_ready(_reference(x, w1, w2))

    assert out.shape == (N, C, 1, 1), out.shape
    assert jnp.allclose(out, ref, atol=1e-5, rtol=1e-5), "mismatch vs reference"

    print("KERNEL_OK")
</pallas_src>

<mosaic_0001>
module attributes {stable_mosaic.version = 11 : i64} {
  func.func @_cam_kernel(%arg0: i32, %arg1: memref<2x32x256xf32, #tpu.memory_space<vmem>>, %arg2: memref<32x2xf32, #tpu.memory_space<vmem>>, %arg3: memref<2x32xf32, #tpu.memory_space<vmem>>, %arg4: memref<2x1x32xf32, #tpu.memory_space<vmem>>) attributes {dimension_semantics = [#tpu.dimension_semantics<parallel>], iteration_bounds = array<i64: 1>, scalar_prefetch = 0 : i64, scratch_operands = 0 : i64, tpu.core_type = #tpu.core_type<tc>, window_params = [{transform_indices = @transform_0, window_bounds = array<i64: 2, 32, 256>}, {pipeline_mode = #tpu.pipeline_mode<synchronous>, transform_indices = @transform_1, window_bounds = array<i64: 32, 2>}, {pipeline_mode = #tpu.pipeline_mode<synchronous>, transform_indices = @transform_2, window_bounds = array<i64: 2, 32>}, {transform_indices = @transform_3, window_bounds = array<i64: 2, 1, 32>}]} {
    %c0 = arith.constant 0 : index
    %c0_0 = arith.constant 0 : index
    %c0_1 = arith.constant 0 : index
    %0 = vector.load %arg1[%c0, %c0_0, %c0_1] : memref<2x32x256xf32, #tpu.memory_space<vmem>>, vector<2x32x256xf32>
    %cst = arith.constant dense<0xFF800000> : vector<2x32xf32>
    %1 = vector.multi_reduction <maximumf>, %0, %cst [2] : vector<2x32x256xf32> to vector<2x32xf32>
    %cst_2 = arith.constant dense<0.000000e+00> : vector<2x32xf32>
    %2 = vector.multi_reduction <add>, %0, %cst_2 [2] : vector<2x32x256xf32> to vector<2x32xf32>
    %cst_3 = arith.constant 3.906250e-03 : f32
    %3 = vector.broadcast %cst_3 : f32 to vector<2x32xf32>
    %4 = arith.mulf %2, %3 : vector<2x32xf32>
    %5 = tpu.concatenate %4, %1 in 0 : vector<2x32xf32>, vector<2x32xf32> -> vector<4x32xf32>
    %c0_4 = arith.constant 0 : index
    %c0_5 = arith.constant 0 : index
    %6 = vector.load %arg2[%c0_4, %c0_5] : memref<32x2xf32, #tpu.memory_space<vmem>>, vector<32x2xf32>
    %cst_6 = arith.constant dense<0.000000e+00> : vector<4x2xf32>
    %7 = tpu.matmul %5, %6, %cst_6 {dimension_numbers = #tpu.dot_dimension_numbers<[1], [0], [0], [1], [0, 0, 1, 1], [], []>} : vector<4x32xf32>, vector<32x2xf32>, vector<4x2xf32> -> vector<4x2xf32>
    %cst_7 = arith.constant 0.000000e+00 : f32
    %8 = vector.broadcast %cst_7 : f32 to vector<4x2xf32>
    %9 = arith.maximumf %7, %8 : vector<4x2xf32>
    %c0_8 = arith.constant 0 : index
    %c0_9 = arith.constant 0 : index
    %10 = vector.load %arg3[%c0_8, %c0_9] : memref<2x32xf32, #tpu.memory_space<vmem>>, vector<2x32xf32>
    %cst_10 = arith.constant dense<0.000000e+00> : vector<4x32xf32>
    %11 = tpu.matmul %9, %10, %cst_10 {dimension_numbers = #tpu.dot_dimension_numbers<[1], [0], [0], [1], [0, 0, 1, 1], [], []>} : vector<4x2xf32>, vector<2x32xf32>, vector<4x32xf32> -> vector<4x32xf32>
    %12 = vector.extract_strided_slice %11 {offsets = [0, 0], sizes = [2, 32], strides = [1, 1]} : vector<4x32xf32> to vector<2x32xf32>
    %13 = vector.extract_strided_slice %11 {offsets = [2, 0], sizes = [2, 32], strides = [1, 1]} : vector<4x32xf32> to vector<2x32xf32>
    %14 = arith.addf %12, %13 : vector<2x32xf32>
    %15 = arith.negf %14 : vector<2x32xf32>
    %16 = math.exp %15 : vector<2x32xf32>
    %cst_11 = arith.constant 1.000000e+00 : f32
    %17 = vector.broadcast %cst_11 : f32 to vector<2x32xf32>
    %18 = arith.addf %17, %16 : vector<2x32xf32>
    %19 = arith.divf %17, %18 : vector<2x32xf32>
    %c0_12 = arith.constant 0 : index
    %c0_13 = arith.constant 0 : index
    %c0_14 = arith.constant 0 : index
    %20 = vector.load %arg4[%c0_12, %c0_13, %c0_14] : memref<2x1x32xf32, #tpu.memory_space<vmem>>, vector<2x1x32xf32>
    %21 = vector.shape_cast %20 : vector<2x1x32xf32> to vector<2x32xf32>
    %22 = vector.shape_cast %19 : vector<2x32xf32> to vector<2x1x32xf32>
    tpu.vector_store %arg4[%c0_12, %c0_13, %c0_14], %22 {strides = array<i32>} : memref<2x1x32xf32, #tpu.memory_space<vmem>>, vector<2x1x32xf32>,
    return
  }
  func.func @transform_0(%arg0: i32) -> (i32, i32, i32) {
    %c0_i32 = arith.constant 0 : i32
    %c0_i32_0 = arith.constant 0 : i32
    %c0_i32_1 = arith.constant 0 : i32
    return %arg0, %c0_i32, %c0_i32_0 : i32, i32, i32
  }
  func.func @transform_1(%arg0: i32) -> (i32, i32) {
    %c0_i32 = arith.constant 0 : i32
    %c0_i32_0 = arith.constant 0 : i32
    %c0_i32_1 = arith.constant 0 : i32
    return %c0_i32, %c0_i32_0 : i32, i32
  }
  func.func @transform_2(%arg0: i32) -> (i32, i32) {
    %c0_i32 = arith.constant 0 : i32
    %c0_i32_0 = arith.constant 0 : i32
    %c0_i32_1 = arith.constant 0 : i32
    return %c0_i32, %c0_i32_0 : i32, i32
  }
  func.func @transform_3(%arg0: i32) -> (i32, i32, i32) {
    %c0_i32 = arith.constant 0 : i32
    %c0_i32_0 = arith.constant 0 : i32
    %c0_i32_1 = arith.constant 0 : i32
    return %arg0, %c0_i32, %c0_i32_0 : i32, i32, i32
  }
}

</mosaic_0001>

<llo_original>
// kernel: tpu_custom_call.1
$region0: #{tpu_custom_call.1}
  #allocation0 [shape = 'u32[]', space=smem, size = 0x4, offset = 0x4, fixed_abs, tag = 'smem constant byte address 0x4 - core index']
  #allocation1 [shape = 'u32[144,128]{1,0:T(1,128)}', space=vmem, size = 0x12000, scoped, tag = 'internal scratch']
  %s0 = inlined_call_operand.hbm [shape: f32[2,32,256], index: 0, kind: input, shape index: {}]
  %s1 = inlined_call_operand.vmem [shape: f32[32,2], index: 1, kind: input, shape index: {}]
  %s2 = inlined_call_operand.vmem [shape: f32[2,32], index: 2, kind: input, shape index: {}]
  %s3 = inlined_call_operand.hbm [shape: f32[2,1,32], index: 3, kind: output, shape index: {}]
  %s4 = sld [smem:[#allocation0]]
  $region26: #{tpu_custom_call.1} parent=0
    _
  %s6 = ssub.s32 1, %s4
  %s7 = scalar_select 0, %s6, %s4
  $region1: #{tpu_custom_call.1} parent=0
    #allocation2 [shape = 'u8[65536]{0}', space=vmem, size = 0x10000, scoped, tag = 'input window, operand 0, single buffered']
    #allocation3 [shape = 's32[1]{0}', space=sflag, size = 0x4, scoped, tag = 'scoped memory for tpu_custom_call.1']
    #allocation4 [shape = 's32[1]{0}', space=sflag, size = 0x4, scoped, tag = 'scoped memory for tpu_custom_call.1']
    #allocation5 [shape = 'u8[1024]{0}', space=vmem, size = 0x400, scoped, tag = 'output window, operand 0, single buffered']
    %8 = vsyncpa [#allocation3], 0
    %9 = vsyncpa [#allocation4], 0
    // Predicated region
    $region2: #{tpu_custom_call.1} parent=1 // pred_check
      _
    $region3: #{tpu_custom_call.1} parent=1 // pred_check_branch
      %11 = sbr.rel (0) target = $region5
    $region4: #{tpu_custom_call.1} parent=1 // pred_region
      %s13 = ssub.s32 2048, 2048
      %14 = vsyncadd [#allocation3], %s13
      %s15 = sshll.u32 [#allocation2], 4
      %s16 = int_to_ptr.vmem [resolvable:$true] %s15
      %21 = dma.hbm_to_vmem [thread:$0]  %s0, 2048, %s16, [#allocation3], 256, 256, 16
    $region5: #{tpu_custom_call.1} parent=1 // pred_fallthru
      _
    // Predicated region
    $region6: #{tpu_custom_call.1} parent=1 // pred_check
      _
    $region7: #{tpu_custom_call.1} parent=1 // pred_check_branch
      %23 = sbr.rel (0) target = $region9
    $region8: #{tpu_custom_call.1} parent=1 // pred_region
      _
    $region9: #{tpu_custom_call.1} parent=1 // pred_fallthru
      _
    // Predicated region
    $region10: #{tpu_custom_call.1} parent=1 // pred_check
      _
    $region11: #{tpu_custom_call.1} parent=1 // pred_check_branch
      %25 = sbr.rel (0) target = $region13
    $region12: #{tpu_custom_call.1} parent=1 // pred_region
      _
    $region13: #{tpu_custom_call.1} parent=1 // pred_fallthru
      _
    // Predicated region
    $region14: #{tpu_custom_call.1} parent=1 // pred_check
      _
    $region15: #{tpu_custom_call.1} parent=1 // pred_check_branch
      %27 = sbr.rel (0) target = $region17
    $region16: #{tpu_custom_call.1} parent=1 // pred_region
      %28 = dma.done [#allocation3], 2048
    $region17: #{tpu_custom_call.1} parent=1 // pred_fallthru
      _
    %v29 = vld [vmem:[#allocation2] sm:$0xff]
    %v30 = vld [vmem:[#allocation2 + $0x8] sm:$0xff]
    %v31 = vld [vmem:[#allocation2 + $0x10] sm:$0xff]
    %v32 = vld [vmem:[#allocation2 + $0x18] sm:$0xff]
    %v33 = vld [vmem:[#allocation2 + $0x20] sm:$0xff]
    %v34 = vld [vmem:[#allocation2 + $0x28] sm:$0xff]
    %v35 = vld [vmem:[#allocation2 + $0x30] sm:$0xff]
    %v36 = vld [vmem:[#allocation2 + $0x38] sm:$0xff]
    %v37 = vld [vmem:[#allocation2 + $0x40] sm:$0xff]
    %v38 = vld [vmem:[#allocation2 + $0x48] sm:$0xff]
    %v39 = vld [vmem:[#allocation2 + $0x50] sm:$0xff]
    %v40 = vld [vmem:[#allocation2 + $0x58] sm:$0xff]
    %v41 = vld [vmem:[#allocation2 + $0x60] sm:$0xff]
    %v42 = vld [vmem:[#allocation2 + $0x68] sm:$0xff]
    %v43 = vld [vmem:[#allocation2 + $0x70] sm:$0xff]
    %v44 = vld [vmem:[#allocation2 + $0x78] sm:$0xff]
    %v45 = vmax.f32 %v29, %v30
    %46 = vmax.xlane.f32.xlu0 %v45
    %v47 = vpop.xlane.xlu0 %46
    %v48 = vmax.f32 %v31, %v32
    %49 = vmax.xlane.f32.xlu0 %v48
    %v50 = vpop.xlane.xlu0 %49
    %v51 = vmax.f32 %v33, %v34
    %52 = vmax.xlane.f32.xlu0 %v51
    %v53 = vpop.xlane.xlu0 %52
    %v54 = vmax.f32 %v35, %v36
    %55 = vmax.xlane.f32.xlu0 %v54
    %v56 = vpop.xlane.xlu0 %55
    %v57 = vmax.f32 %v37, %v38
    %58 = vmax.xlane.f32.xlu0 %v57
    %v59 = vpop.xlane.xlu0 %58
    %v60 = vmax.f32 %v39, %v40
    %61 = vmax.xlane.f32.xlu0 %v60
    %v62 = vpop.xlane.xlu0 %61
    %v63 = vmax.f32 %v41, %v42
    %64 = vmax.xlane.f32.xlu0 %v63
    %v65 = vpop.xlane.xlu0 %64
    %v66 = vmax.f32 %v43, %v44
    %67 = vmax.xlane.f32.xlu0 %v66
    %v68 = vpop.xlane.xlu0 %67
    %v69 = vadd.f32 %v29, %v30
    %70 = vadd.xlane.f32.xlu0 %v69
    %v71 = vpop.xlane.xlu0 %70
    %v72 = vadd.f32 %v31, %v32
    %73 = vadd.xlane.f32.xlu0 %v72
    %v74 = vpop.xlane.xlu0 %73
    %v75 = vadd.f32 %v33, %v34
    %76 = vadd.xlane.f32.xlu0 %v75
    %v77 = vpop.xlane.xlu0 %76
    %v78 = vadd.f32 %v35, %v36
    %79 = vadd.xlane.f32.xlu0 %v78
    %v80 = vpop.xlane.xlu0 %79
    %v81 = vadd.f32 %v37, %v38
    %82 = vadd.xlane.f32.xlu0 %v81
    %v83 = vpop.xlane.xlu0 %82
    %v84 = vadd.f32 %v39, %v40
    %85 = vadd.xlane.f32.xlu0 %v84
    %v86 = vpop.xlane.xlu0 %85
    %v87 = vadd.f32 %v41, %v42
    %88 = vadd.xlane.f32.xlu0 %v87
    %v89 = vpop.xlane.xlu0 %88
    %v90 = vadd.f32 %v43, %v44
    %91 = vadd.xlane.f32.xlu0 %v90
    %v92 = vpop.xlane.xlu0 %91
    %v93 = vmul.f32 %v71, 0.00390625
    %v94 = vmul.f32 %v74, 0.00390625
    %v95 = vmul.f32 %v77, 0.00390625
    %v96 = vmul.f32 %v80, 0.00390625
    %v97 = vmul.f32 %v83, 0.00390625
    %v98 = vmul.f32 %v86, 0.00390625
    %v99 = vmul.f32 %v89, 0.00390625
    %v100 = vmul.f32 %v92, 0.00390625
    %v109 = vlaneseq
    %v110 = vand.u32 %v109, 127
    %v111 = vlaneseq
    %v112 = vshrl.u32 %v111, 7
    %v113 = vsub.s32 %v110, %v112
    %v114 = vrot.slane %v93, %v113
    %v115 = vadd.s32 %v110, 4294967288
    %v116 = vlaneseq
    %v117 = vshrl.u32 %v116, 7
    %v118 = vsub.s32 %v115, %v117
    %v119 = vrot.slane %v94, %v118
    %vm120 = vcmask 130112
    %v121 = vsel %vm120, %v119, %v114
    %v122 = vadd.s32 %v110, 4294967280
    %v123 = vlaneseq
    %v124 = vshrl.u32 %v123, 7
    %v125 = vsub.s32 %v122, %v124
    %v126 = vrot.slane %v95, %v125
    %vm127 = vcmask 195712
    %v128 = vsel %vm127, %v126, %v121
    %v129 = vadd.s32 %v110, 4294967272
    %v130 = vlaneseq
    %v131 = vshrl.u32 %v130, 7
    %v132 = vsub.s32 %v129, %v131
    %v133 = vrot.slane %v96, %v132
    %vm134 = vcmask 261312
    %v135 = vsel %vm134, %v133, %v128
    %v136 = vlaneseq
    %v137 = vshrl.u32 %v136, 7
    %v138 = vsub.s32 %v110, %v137
    %v139 = vrot.slane %v97, %v138
    %v140 = vlaneseq
    %v141 = vshrl.u32 %v140, 7
    %v142 = vsub.s32 %v115, %v141
    %v143 = vrot.slane %v98, %v142
    %v144 = vsel %vm120, %v143, %v139
    %v145 = vlaneseq
    %v146 = vshrl.u32 %v145, 7
    %v147 = vsub.s32 %v122, %v146
    %v148 = vrot.slane %v99, %v147
    %v149 = vsel %vm127, %v148, %v144
    %v150 = vlaneseq
    %v151 = vshrl.u32 %v150, 7
    %v152 = vsub.s32 %v129, %v151
    %v153 = vrot.slane %v100, %v152
    %v154 = vsel %vm134, %v153, %v149
    %vm155 = vcmask 1041409
    %v156 = vsel %vm155, %v154, %v135
    %v166 = vlaneseq
    %v167 = vshrl.u32 %v166, 7
    %v168 = vsub.s32 %v110, %v167
    %v169 = vrot.slane %v47, %v168
    %v170 = vlaneseq
    %v171 = vshrl.u32 %v170, 7
    %v172 = vsub.s32 %v115, %v171
    %v173 = vrot.slane %v50, %v172
    %v174 = vsel %vm120, %v173, %v169
    %v175 = vlaneseq
    %v176 = vshrl.u32 %v175, 7
    %v177 = vsub.s32 %v122, %v176
    %v178 = vrot.slane %v53, %v177
    %v179 = vsel %vm127, %v178, %v174
    %v180 = vlaneseq
    %v181 = vshrl.u32 %v180, 7
    %v182 = vsub.s32 %v129, %v181
    %v183 = vrot.slane %v56, %v182
    %v184 = vsel %vm134, %v183, %v179
    %v185 = vlaneseq
    %v186 = vshrl.u32 %v185, 7
    %v187 = vsub.s32 %v110, %v186
    %v188 = vrot.slane %v59, %v187
    %v189 = vlaneseq
    %v190 = vshrl.u32 %v189, 7
    %v191 = vsub.s32 %v115, %v190
    %v192 = vrot.slane %v62, %v191
    %v193 = vsel %vm120, %v192, %v188
    %v194 = vlaneseq
    %v195 = vshrl.u32 %v194, 7
    %v196 = vsub.s32 %v122, %v195
    %v197 = vrot.slane %v65, %v196
    %v198 = vsel %vm127, %v197, %v193
    %v199 = vlaneseq
    %v200 = vshrl.u32 %v199, 7
    %v201 = vsub.s32 %v129, %v200
    %v202 = vrot.slane %v68, %v201
    %v203 = vsel %vm134, %v202, %v198
    %vm204 = vcmask 1043459
    %v205 = vsel %vm204, %v203, %v184
    %vm207 = vcmask 1041408
    %v208 = vsel %vm207, %v156, %v205
    %v209 = vld [vmem:[%s1] sm:$0xff]
    %v210 = vld [vmem:[%s1 + $0x8] sm:$0xff]
    %v211 = vld [vmem:[%s1 + $0x10] sm:$0xff]
    %v212 = vld [vmem:[%s1 + $0x18] sm:$0xff]
    %vm213 = vcmask 261120
    %v215 = vsel %vm213, %v208, 0
    %217 = vmatprep.subr.mxu0 0.0
    %218 = vmatpush1.msra.mxu0 %v209
    %219 = vmatprep.subr.mxu0 0.0
    %220 = vmatpush1.msra.mxu0 %v210
    %221 = vmatprep.subr.mxu0 0.0
    %222 = vmatpush1.msra.mxu0 %v211
    %223 = vmatprep.subr.mxu0 0.0
    %224 = vmatpush1.msra.mxu0 %v212
    %225 = vmatprep.subr.mxu0 0.0
    %226 = vmatpush1.msra.mxu0 0.0
    %227 = vmatprep.subr.mxu0 0.0
    %228 = vmatpush1.msra.mxu0 0.0
    %229 = vmatprep.subr.mxu0 0.0
    %230 = vmatpush1.msra.mxu0 0.0
    %231 = vmatprep.subr.mxu0 0.0
    %232 = vmatpush1.msra.mxu0 0.0
    %233 = vmatprep.subr.mxu0 0.0
    %234 = vmatpush1.msra.mxu0 0.0
    %235 = vmatprep.subr.mxu0 0.0
    %236 = vmatpush1.msra.mxu0 0.0
    %237 = vmatprep.subr.mxu0 0.0
    %238 = vmatpush1.msra.mxu0 0.0
    %239 = vmatprep.subr.mxu0 0.0
    %240 = vmatpush1.msra.mxu0 0.0
    %241 = vmatprep.subr.mxu0 0.0
    %242 = vmatpush1.msra.mxu0 0.0
    %243 = vmatprep.subr.mxu0 0.0
    %244 = vmatpush1.msra.mxu0 0.0
    %245 = vmatprep.subr.mxu0 0.0
    %246 = vmatpush1.msra.mxu0 0.0
    %247 = vmatprep.subr.mxu0 0.0
    %248 = vmatpush1.msra.mxu0 0.0
    %249 = vmatprep.subr.mxu0 0.0
    %250 = vmatpush1.msra.mxu0 0.0
    %251 = vmatprep.subr.mxu0 0.0
    %252 = vmatpush1.msra.mxu0 0.0
    %253 = vmatprep.subr.mxu0 0.0
    %254 = vmatpush1.msra.mxu0 0.0
    %255 = vmatprep.subr.mxu0 0.0
    %256 = vmatpush1.msra.mxu0 0.0
    %257 = vmatprep.subr.mxu0 0.0
    %258 = vmatpush1.msra.mxu0 0.0
    %259 = vmatprep.subr.mxu0 0.0
    %260 = vmatpush1.msra.mxu0 0.0
    %261 = vmatprep.subr.mxu0 0.0
    %262 = vmatpush1.msra.mxu0 0.0
    %263 = vmatprep.subr.mxu0 0.0
    %264 = vmatpush1.msra.mxu0 0.0
    %265 = vmatprep.subr.mxu0 0.0
    %266 = vmatpush1.msra.mxu0 0.0
    %267 = vmatprep.subr.mxu0 0.0
    %268 = vmatpush1.msra.mxu0 0.0
    %269 = vmatprep.subr.mxu0 0.0
    %270 = vmatpush1.msra.mxu0 0.0
    %271 = vmatprep.subr.mxu0 0.0
    %272 = vmatpush1.msra.mxu0 0.0
    %273 = vmatprep.subr.mxu0 0.0
    %274 = vmatpush1.msra.mxu0 0.0
    %275 = vmatprep.subr.mxu0 0.0
    %276 = vmatpush1.msra.mxu0 0.0
    %277 = vmatprep.subr.mxu0 0.0
    %278 = vmatpush1.msra.mxu0 0.0
    %279 = vmatprep.subr.mxu0 0.0
    %280 = vmatpush1.msra.mxu0 0.0
    %281 = vmatprep.mubr.f32.mxu0 0.0
    %282 = vmatmul.mubr.f32.gmra.mrb[0].mxu0 %v215
    %v283 = vpop.f32.mrb[0].mxu0
    %v284 = vadd.f32 0.0, %v283
    %v285 = vpop.f32.mrb[0].mxu0
    %286 = vdwg.mxu0
    %v287 = vmax.f32 %v284, 0.0
    %v288 = vld [vmem:[%s2] sm:$0x3]
    %vm289 = vcmask 15360
    %v291 = vsel %vm289, %v287, 0
    %v294 = vsel %vm207, %v288, 0
    %296 = vmatprep.subr.mxu0 0.0
    %297 = vmatpush1.msra.mxu0 %v294
    %298 = vmatprep.subr.mxu0 0.0
    %299 = vmatpush1.msra.mxu0 0.0
    %300 = vmatprep.subr.mxu0 0.0
    %301 = vmatpush1.msra.mxu0 0.0
    %302 = vmatprep.subr.mxu0 0.0
    %303 = vmatpush1.msra.mxu0 0.0
    %304 = vmatprep.subr.mxu0 0.0
    %305 = vmatpush1.msra.mxu0 0.0
    %306 = vmatprep.subr.mxu0 0.0
    %307 = vmatpush1.msra.mxu0 0.0
    %308 = vmatprep.subr.mxu0 0.0
    %309 = vmatpush1.msra.mxu0 0.0
    %310 = vmatprep.subr.mxu0 0.0
    %311 = vmatpush1.msra.mxu0 0.0
    %312 = vmatprep.subr.mxu0 0.0
    %313 = vmatpush1.msra.mxu0 0.0
    %314 = vmatprep.subr.mxu0 0.0
    %315 = vmatpush1.msra.mxu0 0.0
    %316 = vmatprep.subr.mxu0 0.0
    %317 = vmatpush1.msra.mxu0 0.0
    %318 = vmatprep.subr.mxu0 0.0
    %319 = vmatpush1.msra.mxu0 0.0
    %320 = vmatprep.subr.mxu0 0.0
    %321 = vmatpush1.msra.mxu0 0.0
    %322 = vmatprep.subr.mxu0 0.0
    %323 = vmatpush1.msra.mxu0 0.0
    %324 = vmatprep.subr.mxu0 0.0
    %325 = vmatpush1.msra.mxu0 0.0
    %326 = vmatprep.subr.mxu0 0.0
    %327 = vmatpush1.msra.mxu0 0.0
    %328 = vmatprep.subr.mxu0 0.0
    %329 = vmatpush1.msra.mxu0 0.0
    %330 = vmatprep.subr.mxu0 0.0
    %331 = vmatpush1.msra.mxu0 0.0
    %332 = vmatprep.subr.mxu0 0.0
    %333 = vmatpush1.msra.mxu0 0.0
    %334 = vmatprep.subr.mxu0 0.0
    %335 = vmatpush1.msra.mxu0 0.0
    %336 = vmatprep.subr.mxu0 0.0
    %337 = vmatpush1.msra.mxu0 0.0
    %338 = vmatprep.subr.mxu0 0.0
    %339 = vmatpush1.msra.mxu0 0.0
    %340 = vmatprep.subr.mxu0 0.0
    %341 = vmatpush1.msra.mxu0 0.0
    %342 = vmatprep.subr.mxu0 0.0
    %343 = vmatpush1.msra.mxu0 0.0
    %344 = vmatprep.subr.mxu0 0.0
    %345 = vmatpush1.msra.mxu0 0.0
    %346 = vmatprep.subr.mxu0 0.0
    %347 = vmatpush1.msra.mxu0 0.0
    %348 = vmatprep.subr.mxu0 0.0
    %349 = vmatpush1.msra.mxu0 0.0
    %350 = vmatprep.subr.mxu0 0.0
    %351 = vmatpush1.msra.mxu0 0.0
    %352 = vmatprep.subr.mxu0 0.0
    %353 = vmatpush1.msra.mxu0 0.0
    %354 = vmatprep.subr.mxu0 0.0
    %355 = vmatpush1.msra.mxu0 0.0
    %356 = vmatprep.subr.mxu0 0.0
    %357 = vmatpush1.msra.mxu0 0.0
    %358 = vmatprep.subr.mxu0 0.0
    %359 = vmatpush1.msra.mxu0 0.0
    %360 = vmatprep.mubr.f32.mxu0 0.0
    %361 = vmatmul.mubr.f32.gmra.mrb[0].mxu0 %v291
    %v362 = vpop.f32.mrb[0].mxu0
    %v363 = vadd.f32 0.0, %v362
    %v364 = vpop.f32.mrb[0].mxu0
    %365 = vdwg.mxu0
    %v367 = vrot.slane %v363, 2
    %v369 = vadd.f32 %v363, %v367
    %v370 = vxor.u32 %v369, 2147483648
    %v371 = vmul.f32 %v370, 1.442695
    %v372 = vpow.pop %v371
    %v373 = vadd.f32 %v372, 1.0
    %v374 = vrcp.pop %v373
    %v375 = vmul.f32 1.0, %v374
    %v378 = vunpack.c.l.s4 1966171168
    %v379 = vunpack.c.0.s8 %v378
    %v380 = vlaneseq
    %v381 = vshrl.u32 %v380, 7
    %v382 = vsub.s32 %v379, %v381
    %v383 = vrot.slane %v375, %v382
    %v384 = vcombine.high %v383, %v383
    %v386 = vunpack.c.l.s4 1966171168
    %v387 = vunpack.c.0.s8 %v386
    %v388 = vlaneseq
    %v389 = vshrl.u32 %v388, 7
    %v390 = vsub.s32 %v387, %v389
    %v391 = vrot.slane %v383, %v390
    %v393 = vunpack.c.l.s4 1966171168
    %v394 = vunpack.c.0.s8 %v393
    %v395 = vlaneseq
    %v396 = vshrl.u32 %v395, 7
    %v397 = vsub.s32 %v394, %v396
    %v398 = vrot.slane %v384, %v397
    %vm401 = vcmask 253952
    %402 = vst.msk [vmem:[#allocation5] sm:$0x1] %vm401, %v391
    %403 = vst.msk [vmem:[#allocation5 + $0x1] sm:$0x1] %vm401, %v398
    // Predicated region
    $region18: #{tpu_custom_call.1} parent=1 // pred_check
      _
    $region19: #{tpu_custom_call.1} parent=1 // pred_check_branch
      %405 = sbr.rel (0) target = $region21
    $region20: #{tpu_custom_call.1} parent=1 // pred_region
      %s407 = ssub.s32 32, 32
      %408 = vsyncadd [#allocation4], %s407
      %s409 = sshll.u32 [#allocation5], 4
      %s410 = int_to_ptr.vmem [resolvable:$true] %s409
      %415 = dma.vmem_to_hbm [thread:$0]  %s410, 32, %s3, [#allocation4], 16, 16, 1
    $region21: #{tpu_custom_call.1} parent=1 // pred_fallthru
      _
    // Predicated region
    $region22: #{tpu_custom_call.1} parent=1 // pred_check
      _
    $region23: #{tpu_custom_call.1} parent=1 // pred_check_branch
      %417 = sbr.rel (0) target = $region25
    $region24: #{tpu_custom_call.1} parent=1 // pred_region
      %418 = dma.done [#allocation4], 32
    $region25: #{tpu_custom_call.1} parent=1 // pred_fallthru
      _
    %419 = vsyncpa [#allocation3], 1
    %420 = vsyncpa [#allocation4], 1

</llo_original>
